<compile_context>
chip_gen: v5e
topology: v5e:2x2
jax: 0.10.0
libtpu: 0.0.40
codegen_flags: <defaults>
</compile_context>

<pallas_src>
import jax
import jax.numpy as jnp
from jax.experimental import pallas as pl
from jax.experimental.pallas import tpu as pltpu


def _cdiv(a, b):
    return -(-a // b)


def _round_up(n, m):
    return _cdiv(n, m) * m


def ffnn_kernel(x_ref, w1_ref, b1_ref, w2_ref, b2_ref, w3_ref, b3_ref, o_ref):
    # x_ref:  (block_b, F)  f32/bf16  (ragged last tile may hold garbage rows past B;
    #                                  those rows only feed masked-off output rows)
    # w1_ref: (F, 128)      bf16      natural (in, out) layout
    # b1_ref: (1, 128)      f32
    # w2_ref: (128, 64)     bf16
    # b2_ref: (1, 64)       f32
    # w3_ref: (1, 64)       f32
    # b3_ref: (1, 1)        f32
    # o_ref:  (block_b, 1)  f32
    x = x_ref[...].astype(jnp.bfloat16)

    # ---- layer 1: (block_b, F) @ (F, 128), natural MXU orientation, f32 accumulate ----
    h1 = jnp.dot(x, w1_ref[...], preferred_element_type=jnp.float32)
    h1 = jnp.maximum(h1 + b1_ref[...], 0.0)

    # ---- layer 2: (block_b, 128) @ (128, 64) ----
    h2 = jnp.dot(h1.astype(jnp.bfloat16), w2_ref[...],
                 preferred_element_type=jnp.float32)
    h2 = jnp.maximum(h2 + b2_ref[...], 0.0)

    # ---- layer 3 (64 -> 1): VPU multiply + lane reduce (avoids an N=1 MXU matmul) ----
    h3 = jnp.sum(h2 * w3_ref[...], axis=-1, keepdims=True) + b3_ref[...]   # (block_b, 1)

    # ---- numerically-stable sigmoid on the EUP (exp argument is always <= 0) ----
    neg = h3 < 0.0
    z = jnp.exp(jnp.where(neg, h3, -h3))
    r = pl.reciprocal(1.0 + z, approx=True)
    o_ref[...] = jnp.where(neg, z * r, r).astype(o_ref.dtype)


def _vmem_budget_and_limit():
    """(tile-sizing budget, vmem_limit_bytes) chosen per TPU generation."""
    try:
        kind = jax.devices()[0].device_kind.lower()
    except Exception:  # pragma: no cover
        kind = ""
    if any(tag in kind for tag in ("v5 lite", "v5e", "v6 lite", "v6e", "trillium")):
        return 72 << 20, 96 << 20          # 128 MiB physical VMEM per core
    # Conservative default (covers v7x: only 64 MiB VMEM per TensorCore).
    return 36 << 20, 48 << 20


def _pick_tile(B, F, x_itemsize, vmem_budget):
    """Pick (block_b, num_grid_steps) for the batch axis."""
    if B <= 128:
        return B, 1   # one block == full array (any B allowed by the layout rules)
    # Per-batch-row VMEM bytes: double-buffered x tile + in-kernel bf16 copy of x
    # + f32 h1/h2/h3 intermediates.
    per_row = 2 * F * x_itemsize + 2 * F + (128 + 64 + 1) * 4
    # Grid-invariant weights/biases are double-buffered by the default pipeline.
    w_bytes = 2 * (F * 128 * 2 + 128 * 64 * 2 + (128 + 64 + 64 + 1) * 4)
    avail = max(vmem_budget - w_bytes, 128 * per_row)
    block_b_max = max(128, min(8192, (avail // per_row) // 8 * 8))
    # Tail balancing (avoid up to block_b-1 wasted rows of HBM reads) + even step
    # count so the "parallel" batch axis splits across both v7x TensorCores.
    nb = _cdiv(B, block_b_max)
    if nb == 1:
        nb = 2
    elif nb % 2 == 1:
        nb += 1
    block_b = min(block_b_max, max(8, _round_up(_cdiv(B, nb), 8)))
    nb = _cdiv(B, block_b)
    return block_b, nb


@jax.jit
def ffnn_forward(x, params):
    """x: (B, n_features) float32 or bfloat16. Returns (B, 1) float32."""
    w1, b1, w2, b2, w3, b3 = params
    B, F = x.shape

    budget, vmem_limit = _vmem_budget_and_limit()
    block_b, nb = _pick_tile(B, F, jnp.dtype(x.dtype).itemsize, budget)

    # One-time tiny weight casts (bf16 MXU operands); biases stay f32.
    w1_bf = w1.astype(jnp.bfloat16)
    w2_bf = w2.astype(jnp.bfloat16)

    # TODO(synk): for very large n_features add a K grid axis over F with an f32 scratch
    # accumulator (pl.when init/finalize) so the whole feature row need not be resident.

    full = lambda a: pl.BlockSpec(a.shape, lambda i: (0, 0))

    out = pl.pallas_call(
        ffnn_kernel,
        out_shape=jax.ShapeDtypeStruct((B, 1), jnp.float32),
        grid_spec=pltpu.PrefetchScalarGridSpec(
            num_scalar_prefetch=0,
            grid=(nb,),
            in_specs=[
                pl.BlockSpec((block_b, F), lambda i: (i, 0)),  # x tile, no wrapper pad
                full(w1_bf),   # (F, 128)  resident across the grid
                full(b1),      # (1, 128)
                full(w2_bf),   # (128, 64)
                full(b2),      # (1, 64)
                full(w3),      # (1, 64)
                full(b3),      # (1, 1)
            ],
            out_specs=pl.BlockSpec((block_b, 1), lambda i: (i, 0)),
        ),
        compiler_params=pltpu.CompilerParams(
            dimension_semantics=("parallel",),   # batch axis shardable across TCs (v7x)
            vmem_limit_bytes=vmem_limit,
        ),
    )(x, w1_bf, b1, w2_bf, b2, w3, b3)
    return out


def init_params(key, n_features):
    """Deterministic init mirroring nn.Linear, stored in natural (in, out) layout."""
    ks = jax.random.split(key, 6)

    def linear(kw, kb, fan_in, fan_out):
        bound = 1.0 / jnp.sqrt(jnp.float32(fan_in))
        w = jax.random.uniform(kw, (fan_in, fan_out), jnp.float32, -bound, bound)
        b = jax.random.uniform(kb, (1, fan_out), jnp.float32, -bound, bound)
        return w, b

    w1, b1 = linear(ks[0], ks[1], n_features, 128)
    w2, b2 = linear(ks[2], ks[3], 128, 64)
    w3, b3 = linear(ks[4], ks[5], 64, 1)
    # Layer-3 weight stored as a (1, 64) row for the in-kernel VPU reduction.
    return (w1, b1, w2, b2, w3.T, b3)


def ffnn_ref(x, params):
    """Pure f32 JAX reference matching the PyTorch forward."""
    w1, b1, w2, b2, w3, b3 = params
    h = jax.nn.relu(x @ w1 + b1)
    h = jax.nn.relu(h @ w2 + b2)
    return jax.nn.sigmoid(h @ w3.T + b3)   # w3: (1, 64), b3: (1, 1)


if __name__ == "__main__":
    key = jax.random.PRNGKey(0)
    kx, kp = jax.random.split(key)

    n_features = 32
    params = init_params(kp, n_features)

    # Small single-tile shape and a ragged multi-tile shape (exercises masked tail).
    for batch in (8, 300):
        x = jax.random.normal(kx, (batch, n_features), dtype=jnp.float32)
        out = ffnn_forward(x, params)
        jax.block_until_ready(out)

        ref = ffnn_ref(x, params)
        assert out.shape == (batch, 1), out.shape
        err = float(jnp.max(jnp.abs(out - ref)))
        # bf16 MXU operands + approx reciprocal -> loose tolerance vs the f32 reference.
        assert jnp.allclose(out, ref, atol=2e-2, rtol=2e-2), err

    print("KERNEL_OK")
</pallas_src>

<mosaic_0001>
module attributes {stable_mosaic.version = 11 : i64} {
  func.func @ffnn_kernel(%arg0: i32, %arg1: memref<8x32xf32, #tpu.memory_space<vmem>>, %arg2: memref<32x128xbf16, #tpu.memory_space<vmem>>, %arg3: memref<1x128xf32, #tpu.memory_space<vmem>>, %arg4: memref<128x64xbf16, #tpu.memory_space<vmem>>, %arg5: memref<1x64xf32, #tpu.memory_space<vmem>>, %arg6: memref<1x64xf32, #tpu.memory_space<vmem>>, %arg7: memref<1x1xf32, #tpu.memory_space<vmem>>, %arg8: memref<8x1xf32, #tpu.memory_space<vmem>>) attributes {dimension_semantics = [#tpu.dimension_semantics<parallel>], iteration_bounds = array<i64: 1>, scalar_prefetch = 0 : i64, scratch_operands = 0 : i64, tpu.core_type = #tpu.core_type<tc>, window_params = [{transform_indices = @transform_0, window_bounds = array<i64: 8, 32>}, {pipeline_mode = #tpu.pipeline_mode<synchronous>, transform_indices = @transform_1, window_bounds = array<i64: 32, 128>}, {pipeline_mode = #tpu.pipeline_mode<synchronous>, transform_indices = @transform_2, window_bounds = array<i64: 1, 128>}, {pipeline_mode = #tpu.pipeline_mode<synchronous>, transform_indices = @transform_3, window_bounds = array<i64: 128, 64>}, {pipeline_mode = #tpu.pipeline_mode<synchronous>, transform_indices = @transform_4, window_bounds = array<i64: 1, 64>}, {pipeline_mode = #tpu.pipeline_mode<synchronous>, transform_indices = @transform_5, window_bounds = array<i64: 1, 64>}, {pipeline_mode = #tpu.pipeline_mode<synchronous>, transform_indices = @transform_6, window_bounds = array<i64: 1, 1>}, {transform_indices = @transform_7, window_bounds = array<i64: 8, 1>}]} {
    %c0 = arith.constant 0 : index
    %c0_0 = arith.constant 0 : index
    %0 = vector.load %arg1[%c0, %c0_0] : memref<8x32xf32, #tpu.memory_space<vmem>>, vector<8x32xf32>
    %1 = arith.truncf %0 : vector<8x32xf32> to vector<8x32xbf16>
    %c0_1 = arith.constant 0 : index
    %c0_2 = arith.constant 0 : index
    %2 = vector.load %arg2[%c0_1, %c0_2] : memref<32x128xbf16, #tpu.memory_space<vmem>>, vector<32x128xbf16>
    %cst = arith.constant dense<0.000000e+00> : vector<8x128xf32>
    %3 = tpu.matmul %1, %2, %cst {dimension_numbers = #tpu.dot_dimension_numbers<[1], [0], [0], [1], [0, 0, 1, 1], [], []>} : vector<8x32xbf16>, vector<32x128xbf16>, vector<8x128xf32> -> vector<8x128xf32>
    %c0_3 = arith.constant 0 : index
    %c0_4 = arith.constant 0 : index
    %4 = vector.load %arg3[%c0_3, %c0_4] : memref<1x128xf32, #tpu.memory_space<vmem>>, vector<1x128xf32>
    %5 = vector.broadcast %4 : vector<1x128xf32> to vector<8x128xf32>
    %6 = arith.addf %3, %5 : vector<8x128xf32>
    %cst_5 = arith.constant 0.000000e+00 : f32
    %7 = vector.broadcast %cst_5 : f32 to vector<8x128xf32>
    %8 = arith.maximumf %6, %7 : vector<8x128xf32>
    %9 = arith.truncf %8 : vector<8x128xf32> to vector<8x128xbf16>
    %c0_6 = arith.constant 0 : index
    %c0_7 = arith.constant 0 : index
    %10 = vector.load %arg4[%c0_6, %c0_7] : memref<128x64xbf16, #tpu.memory_space<vmem>>, vector<128x64xbf16>
    %cst_8 = arith.constant dense<0.000000e+00> : vector<8x64xf32>
    %11 = tpu.matmul %9, %10, %cst_8 {dimension_numbers = #tpu.dot_dimension_numbers<[1], [0], [0], [1], [0, 0, 1, 1], [], []>} : vector<8x128xbf16>, vector<128x64xbf16>, vector<8x64xf32> -> vector<8x64xf32>
    %c0_9 = arith.constant 0 : index
    %c0_10 = arith.constant 0 : index
    %12 = vector.load %arg5[%c0_9, %c0_10] : memref<1x64xf32, #tpu.memory_space<vmem>>, vector<1x64xf32>
    %13 = vector.broadcast %12 : vector<1x64xf32> to vector<8x64xf32>
    %14 = arith.addf %11, %13 : vector<8x64xf32>
    %cst_11 = arith.constant 0.000000e+00 : f32
    %15 = vector.broadcast %cst_11 : f32 to vector<8x64xf32>
    %16 = arith.maximumf %14, %15 : vector<8x64xf32>
    %c0_12 = arith.constant 0 : index
    %c0_13 = arith.constant 0 : index
    %17 = vector.load %arg6[%c0_12, %c0_13] : memref<1x64xf32, #tpu.memory_space<vmem>>, vector<1x64xf32>
    %18 = vector.broadcast %17 : vector<1x64xf32> to vector<8x64xf32>
    %19 = arith.mulf %16, %18 : vector<8x64xf32>
    %cst_14 = arith.constant dense<0.000000e+00> : vector<8xf32>
    %20 = vector.multi_reduction <add>, %19, %cst_14 [1] : vector<8x64xf32> to vector<8xf32>
    %21 = vector.shape_cast %20 : vector<8xf32> to vector<8x1xf32>
    %c0_15 = arith.constant 0 : index
    %c0_16 = arith.constant 0 : index
    %22 = vector.load %arg7[%c0_15, %c0_16] : memref<1x1xf32, #tpu.memory_space<vmem>>, vector<1x1xf32>
    %23 = vector.broadcast %22 : vector<1x1xf32> to vector<8x1xf32>
    %24 = arith.addf %21, %23 : vector<8x1xf32>
    %cst_17 = arith.constant 0.000000e+00 : f32
    %25 = vector.broadcast %cst_17 : f32 to vector<8x1xf32>
    %26 = arith.cmpf olt, %24, %25 : vector<8x1xf32>
    %cst_18 = arith.constant 0.000000e+00 : f32
    %27 = vector.broadcast %cst_18 : f32 to vector<8x1xf32>
    %28 = arith.subf %27, %24 : vector<8x1xf32>
    %29 = arith.select %26, %24, %28 : vector<8x1xi1>, vector<8x1xf32>
    %30 = math.exp %29 : vector<8x1xf32>
    %cst_19 = arith.constant 1.000000e+00 : f32
    %31 = vector.broadcast %cst_19 : f32 to vector<8x1xf32>
    %32 = arith.addf %31, %30 : vector<8x1xf32>
    %33 = tpu.reciprocal %32 {approx = true} : vector<8x1xf32> -> vector<8x1xf32>
    %34 = arith.mulf %30, %33 : vector<8x1xf32>
    %35 = arith.select %26, %34, %33 : vector<8x1xi1>, vector<8x1xf32>
    %c0_20 = arith.constant 0 : index
    %c0_21 = arith.constant 0 : index
    %36 = vector.load %arg8[%c0_20, %c0_21] : memref<8x1xf32, #tpu.memory_space<vmem>>, vector<8x1xf32>
    tpu.vector_store %arg8[%c0_20, %c0_21], %35 {strides = array<i32>} : memref<8x1xf32, #tpu.memory_space<vmem>>, vector<8x1xf32>,
    return
  }
  func.func @transform_0(%arg0: i32) -> (i32, i32) {
    %c0_i32 = arith.constant 0 : i32
    %c0_i32_0 = arith.constant 0 : i32
    return %arg0, %c0_i32 : i32, i32
  }
  func.func @transform_1(%arg0: i32) -> (i32, i32) {
    %c0_i32 = arith.constant 0 : i32
    %c0_i32_0 = arith.constant 0 : i32
    %c0_i32_1 = arith.constant 0 : i32
    return %c0_i32, %c0_i32_0 : i32, i32
  }
  func.func @transform_2(%arg0: i32) -> (i32, i32) {
    %c0_i32 = arith.constant 0 : i32
    %c0_i32_0 = arith.constant 0 : i32
    %c0_i32_1 = arith.constant 0 : i32
    return %c0_i32, %c0_i32_0 : i32, i32
  }
  func.func @transform_3(%arg0: i32) -> (i32, i32) {
    %c0_i32 = arith.constant 0 : i32
    %c0_i32_0 = arith.constant 0 : i32
    %c0_i32_1 = arith.constant 0 : i32
    return %c0_i32, %c0_i32_0 : i32, i32
  }
  func.func @transform_4(%arg0: i32) -> (i32, i32) {
    %c0_i32 = arith.constant 0 : i32
    %c0_i32_0 = arith.constant 0 : i32
    %c0_i32_1 = arith.constant 0 : i32
    return %c0_i32, %c0_i32_0 : i32, i32
  }
  func.func @transform_5(%arg0: i32) -> (i32, i32) {
    %c0_i32 = arith.constant 0 : i32
    %c0_i32_0 = arith.constant 0 : i32
    %c0_i32_1 = arith.constant 0 : i32
    return %c0_i32, %c0_i32_0 : i32, i32
  }
  func.func @transform_6(%arg0: i32) -> (i32, i32) {
    %c0_i32 = arith.constant 0 : i32
    %c0_i32_0 = arith.constant 0 : i32
    %c0_i32_1 = arith.constant 0 : i32
    return %c0_i32, %c0_i32_0 : i32, i32
  }
  func.func @transform_7(%arg0: i32) -> (i32, i32) {
    %c0_i32 = arith.constant 0 : i32
    %c0_i32_0 = arith.constant 0 : i32
    return %arg0, %c0_i32 : i32, i32
  }
}

</mosaic_0001>

<llo_original>
// kernel: ffnn_forward.1
$region0: #{ffnn_forward.1}
  #allocation0 [shape = 'u32[]', space=smem, size = 0x4, offset = 0x4, fixed_abs, tag = 'smem constant byte address 0x4 - core index']
  #allocation1 [shape = 'u32[72,128]{1,0:T(1,128)}', space=vmem, size = 0x9000, scoped, tag = 'internal scratch']
  #allocation2 [shape = 'f32[1,1]{1,0:T(1,128)S(1)}', space=vmem, size = 0x200, scoped, tag = 'scoped memory for ffnn_forward.1']
  %s0 = inlined_call_operand.vmem [shape: f32[8,32], index: 0, kind: input, shape index: {}]
  %s1 = inlined_call_operand.vmem [shape: bf16[32,128], index: 1, kind: input, shape index: {}]
  %s2 = inlined_call_operand.vmem [shape: f32[1,128], index: 2, kind: input, shape index: {}]
  %s3 = inlined_call_operand.vmem [shape: bf16[128,64], index: 3, kind: input, shape index: {}]
  %s4 = inlined_call_operand.vmem [shape: f32[1,64], index: 4, kind: input, shape index: {}]
  %s5 = inlined_call_operand.vmem [shape: f32[1,64], index: 5, kind: input, shape index: {}]
  %s6 = inlined_call_operand.<no memory space> [shape: f32[1,1], index: 6, kind: input, shape index: {}]
  %s7 = inlined_call_operand.vmem [shape: f32[8,1], index: 7, kind: output, shape index: {}]
  %s8 = sld [smem:[#allocation0]]
  $region38: #{ffnn_forward.1} parent=0
    _
  %s10 = ssub.s32 1, %s8
  %s11 = scalar_select 0, %s10, %s8
  %v12 = vstv %s6
  %13 = vst [vmem:[#allocation2] sm:$0x1] %v12
  // Predicated region
  $region2: #{ffnn_forward.1} parent=0 // pred_check
    _
  $region3: #{ffnn_forward.1} parent=0 // pred_check_branch
    %15 = sbr.rel (0) target = $region5
  $region4: #{ffnn_forward.1} parent=0 // pred_region
    _
  $region5: #{ffnn_forward.1} parent=0 // pred_fallthru
    _
  // Predicated region
  $region6: #{ffnn_forward.1} parent=0 // pred_check
    _
  $region7: #{ffnn_forward.1} parent=0 // pred_check_branch
    %17 = sbr.rel (0) target = $region9
  $region8: #{ffnn_forward.1} parent=0 // pred_region
    _
  $region9: #{ffnn_forward.1} parent=0 // pred_fallthru
    _
  // Predicated region
  $region10: #{ffnn_forward.1} parent=0 // pred_check
    _
  $region11: #{ffnn_forward.1} parent=0 // pred_check_branch
    %19 = sbr.rel (0) target = $region13
  $region12: #{ffnn_forward.1} parent=0 // pred_region
    _
  $region13: #{ffnn_forward.1} parent=0 // pred_fallthru
    _
  // Predicated region
  $region14: #{ffnn_forward.1} parent=0 // pred_check
    _
  $region15: #{ffnn_forward.1} parent=0 // pred_check_branch
    %21 = sbr.rel (0) target = $region17
  $region16: #{ffnn_forward.1} parent=0 // pred_region
    _
  $region17: #{ffnn_forward.1} parent=0 // pred_fallthru
    _
  // Predicated region
  $region18: #{ffnn_forward.1} parent=0 // pred_check
    _
  $region19: #{ffnn_forward.1} parent=0 // pred_check_branch
    %23 = sbr.rel (0) target = $region21
  $region20: #{ffnn_forward.1} parent=0 // pred_region
    _
  $region21: #{ffnn_forward.1} parent=0 // pred_fallthru
    _
  // Predicated region
  $region22: #{ffnn_forward.1} parent=0 // pred_check
    _
  $region23: #{ffnn_forward.1} parent=0 // pred_check_branch
    %25 = sbr.rel (0) target = $region25
  $region24: #{ffnn_forward.1} parent=0 // pred_region
    _
  $region25: #{ffnn_forward.1} parent=0 // pred_fallthru
    _
  // Predicated region
  $region26: #{ffnn_forward.1} parent=0 // pred_check
    _
  $region27: #{ffnn_forward.1} parent=0 // pred_check_branch
    %27 = sbr.rel (0) target = $region29
  $region28: #{ffnn_forward.1} parent=0 // pred_region
    _
  $region29: #{ffnn_forward.1} parent=0 // pred_fallthru
    _
  %v29 = vld [vmem:[%s0] sm:$0xff]
  %v30 = vpack.c.bf16 %v29, %v29
  %v31 = vld [vmem:[%s1] sm:$0xf]
  %v32 = vld [vmem:[%s1 + $0x4] sm:$0xf]
  %v33 = vld [vmem:[%s1 + $0x8] sm:$0xf]
  %v34 = vld [vmem:[%s1 + $0xc] sm:$0xf]
  %v35 = vld [vmem:[%s2] sm:$0x1]
  %v37 = vperm.slane %v35, 0
  %v43 = vunpack.c.l.b16 %v31
  %v44 = vunpack.c.l.b16 %v32
  %v45 = vunpack.c.l.b16 %v33
  %v46 = vunpack.c.l.b16 %v34
  %v47 = vpack.c.b16 %v44, %v43
  %v48 = vpack.c.b16 %v46, %v45
  %vm51 = vcmask 261120
  %v53 = vsel %vm51, %v30, 0
  %55 = vmatpush.bf16.msra.mxu0 0
  %56 = vmatpush.bf16.msra.mxu0 0
  %57 = vmatpush.bf16.msra.mxu0 0
  %58 = vmatpush.bf16.msra.mxu0 0
  %59 = vmatpush.bf16.msra.mxu0 0
  %60 = vmatpush.bf16.msra.mxu0 0
  %61 = vmatpush.bf16.msra.mxu0 %v48
  %62 = vmatpush.bf16.msra.mxu0 %v47
  %63 = vmatmul.bf16.gmra.mxu0 %v53
  %v64 = vpop.f32.mrf.mxu0
  %v65 = vadd.f32 %v37, %v64
  %v66 = vpop.f32.mrf.mxu0
  %67 = vdwg.mxu0
  %v68 = vmax.f32 %v65, 0.0
  %v69 = vpack.c.bf16 %v68, %v68
  %v70 = vld [vmem:[%s3] sm:$0xf]
  %v71 = vld [vmem:[%s3 + $0x4] sm:$0xf]
  %v72 = vld [vmem:[%s3 + $0x8] sm:$0xf]
  %v73 = vld [vmem:[%s3 + $0xc] sm:$0xf]
  %v74 = vld [vmem:[%s3 + $0x10] sm:$0xf]
  %v75 = vld [vmem:[%s3 + $0x14] sm:$0xf]
  %v76 = vld [vmem:[%s3 + $0x18] sm:$0xf]
  %v77 = vld [vmem:[%s3 + $0x1c] sm:$0xf]
  %v78 = vld [vmem:[%s3 + $0x20] sm:$0xf]
  %v79 = vld [vmem:[%s3 + $0x24] sm:$0xf]
  %v80 = vld [vmem:[%s3 + $0x28] sm:$0xf]
  %v81 = vld [vmem:[%s3 + $0x2c] sm:$0xf]
  %v82 = vld [vmem:[%s3 + $0x30] sm:$0xf]
  %v83 = vld [vmem:[%s3 + $0x34] sm:$0xf]
  %v84 = vld [vmem:[%s3 + $0x38] sm:$0xf]
  %v85 = vld [vmem:[%s3 + $0x3c] sm:$0xf]
  %v86 = vld [vmem:[%s4] sm:$0x1]
  %v88 = vperm.slane %v86, 0
  %v106 = vunpack.c.l.b16 %v70
  %v107 = vunpack.c.l.b16 %v71
  %v108 = vunpack.c.l.b16 %v72
  %v109 = vunpack.c.l.b16 %v73
  %v110 = vunpack.c.l.b16 %v74
  %v111 = vunpack.c.l.b16 %v75
  %v112 = vunpack.c.l.b16 %v76
  %v113 = vunpack.c.l.b16 %v77
  %v114 = vunpack.c.l.b16 %v78
  %v115 = vunpack.c.l.b16 %v79
  %v116 = vunpack.c.l.b16 %v80
  %v117 = vunpack.c.l.b16 %v81
  %v118 = vunpack.c.l.b16 %v82
  %v119 = vunpack.c.l.b16 %v83
  %v120 = vunpack.c.l.b16 %v84
  %v121 = vunpack.c.l.b16 %v85
  %v122 = vpack.c.b16 %v107, %v106
  %v123 = vpack.c.b16 %v109, %v108
  %v124 = vpack.c.b16 %v111, %v110
  %v125 = vpack.c.b16 %v113, %v112
  %v126 = vpack.c.b16 %v115, %v114
  %v127 = vpack.c.b16 %v117, %v116
  %v128 = vpack.c.b16 %v119, %v118
  %v129 = vpack.c.b16 %v121, %v120
  %138 = vmatpush.bf16.msra.mxu0 %v129
  %139 = vmatpush.bf16.msra.mxu0 %v128
  %140 = vmatpush.bf16.msra.mxu0 %v127
  %141 = vmatpush.bf16.msra.mxu0 %v126
  %142 = vmatpush.bf16.msra.mxu0 %v125
  %143 = vmatpush.bf16.msra.mxu0 %v124
  %144 = vmatpush.bf16.msra.mxu0 %v123
  %145 = vmatpush.bf16.msra.mxu0 %v122
  %146 = vmatmul.bf16.gmra.mxu0 %v69
  %v147 = vpop.f32.mrf.mxu0
  %v148 = vadd.f32 %v88, %v147
  %v149 = vpop.f32.mrf.mxu0
  %150 = vdwg.mxu0
  %v151 = vmax.f32 %v148, 0.0
  %v152 = vld [vmem:[%s5] sm:$0x1]
  %v154 = vperm.slane %v152, 0
  %v156 = vmul.f32 %v151, %v154
  %vm157 = vcmask 523264
  %v158 = vsel %vm157, %v156, 0.0
  %159 = vadd.xlane.f32.xlu0 %v158
  %v160 = vpop.xlane.xlu0 %159
  %v161 = vld [vmem:[#allocation2] sm:$0x1]
  %v163 = vperm.slane %v161, 0
  %v165 = vadd.f32 %v160, %v163
  %vm166 = vcmp.lt.f32.partialorder %v165, 0.0
  %v167 = vsub.f32 0.0, %v165
  %v168 = vsel %vm166, %v165, %v167
  %v169 = vmul.f32 %v168, 1.442695
  %v170 = vpow.pop %v169
  %v171 = vadd.f32 %v170, 1.0
  %v172 = vrcp.pop %v171
  %v173 = vmul.f32 %v170, %v172
  %v174 = vsel %vm166, %v173, %v172
  %vm175 = vcmask 7168
  %176 = vst.msk [vmem:[%s7] sm:$0xff] %vm175, %v174
  // Predicated region
  $region30: #{ffnn_forward.1} parent=0 // pred_check
    _
  $region31: #{ffnn_forward.1} parent=0 // pred_check_branch
    %178 = sbr.rel (0) target = $region33
  $region32: #{ffnn_forward.1} parent=0 // pred_region
    _
  $region33: #{ffnn_forward.1} parent=0 // pred_fallthru
    _
  // Predicated region
  $region34: #{ffnn_forward.1} parent=0 // pred_check
    _
  $region35: #{ffnn_forward.1} parent=0 // pred_check_branch
    %180 = sbr.rel (0) target = $region37
  $region36: #{ffnn_forward.1} parent=0 // pred_region
    _
  $region37: #{ffnn_forward.1} parent=0 // pred_fallthru
    _

</llo_original>
